<compile_context>
chip_gen: v5e
topology: v5e:2x2
jax: 0.10.0
libtpu: 0.0.40
codegen_flags: <defaults>
</compile_context>

<pallas_src>
import jax
import jax.numpy as jnp
from jax.experimental import pallas as pl
from jax.experimental.pallas import tpu as pltpu


# --------------------------------------------------------------------------
# Plain-JAX glue (matches GraphConv.__init__'s Laplacian precompute).
# --------------------------------------------------------------------------
def calculate_laplacian_with_self_loop(matrix: jnp.ndarray) -> jnp.ndarray:
    """D^-1/2 (A + I) D^-1/2, matching the PyTorch reference."""
    matrix = jnp.where(
        matrix[0, 0] == 0,
        matrix + jnp.eye(matrix.shape[0], dtype=matrix.dtype),
        matrix,
    )
    row_sum = matrix.sum(axis=1)
    d_inv_sqrt = jnp.power(row_sum, -0.5).reshape(-1)
    d_inv_sqrt = jnp.where(jnp.isinf(d_inv_sqrt), 0.0, d_inv_sqrt)
    # (A @ diag(d)).T @ diag(d) == d[:, None] * A.T * d[None, :]  (exact identity)
    return d_inv_sqrt[:, None] * matrix.T * d_inv_sqrt[None, :]


# --------------------------------------------------------------------------
# Pallas kernel: one (row-tile i, reduction-tile k) step of DAD @ M + bias.
# --------------------------------------------------------------------------
def _dad_matmul_kernel(dad_ref, m_ref, bias_ref, o_ref, acc_ref):
    k = pl.program_id(1)

    @pl.when(k == 0)
    def _init():
        acc_ref[...] = jnp.zeros_like(acc_ref)

    # bf16 x bf16 -> f32 accumulate (peak MXU path).
    acc_ref[...] += jnp.dot(dad_ref[...], m_ref[...],
                            preferred_element_type=jnp.float32)

    @pl.when(k == pl.num_programs(1) - 1)
    def _finalize():
        o_ref[...] = (acc_ref[...] + bias_ref[...]).astype(o_ref.dtype)


# --------------------------------------------------------------------------
# Wrapper helpers.
# --------------------------------------------------------------------------
def _round_up(x: int, m: int) -> int:
    return ((x + m - 1) // m) * m


def _vmem_budget_bytes() -> int:
    """Per-generation scoped-VMEM budget with ~25% headroom for compiler scratch."""
    try:
        cap = int(pltpu.get_tpu_info().vmem_capacity_bytes)
    except Exception:
        cap = 64 * 2**20  # conservative fallback: v7x has 64 MiB / TC
    # v7x: 64 MiB -> 48 MiB budget; v5e/v6e: 128 MiB -> 96 MiB budget.
    return (cap * 3) // 4


def _choose_tiles(n_pad: int, l_pad: int, budget: int):
    """Pick (tm, tk): largest tm first (cuts M HBM re-reads), then largest tk."""
    cands = [t for t in (1024, 512, 256, 128) if t <= n_pad and n_pad % t == 0]
    if not cands:
        cands = [n_pad]
    # Keep >= 2 row tiles whenever possible so the "parallel" axis shards
    # across both TensorCores on v7x.
    tm_cands = [t for t in cands if n_pad // t >= 2] or cands

    def vmem_est(tm, tk):
        # double-buffered bf16 DAD/M tiles + double-buffered f32 out tile
        # + resident f32 accumulator + bias row.
        return (2 * (tm * tk * 2 + tk * l_pad * 2 + tm * l_pad * 4)
                + tm * l_pad * 4 + 2 * l_pad * 4)

    for tm in tm_cands:
        for tk in cands:
            if vmem_est(tm, tk) <= budget:
                return tm, tk, vmem_est(tm, tk)
    tm = tk = cands[-1]
    return tm, tk, vmem_est(tm, tk)


def _dad_matmul(dad: jnp.ndarray, m: jnp.ndarray, bias_row: jnp.ndarray,
                out_dtype) -> jnp.ndarray:
    """Z(N, L) = DAD(N, N) @ M(N, L) + bias_row(1, L) via a tiled Pallas kernel."""
    N = dad.shape[0]
    L = m.shape[1]

    # Pad N to a tile-friendly multiple (256 granularity for large graphs so
    # v6e/v7x 256-wide MXU tiles divide evenly; 128 otherwise), and pad the
    # folded lane dim to a 128 multiple for unmasked, lane-dense stores.
    n_gran = 256 if N >= 512 else 128
    n_pad = _round_up(N, n_gran)
    l_pad = _round_up(L, 128)

    budget = _vmem_budget_bytes()
    tm, tk, est = _choose_tiles(n_pad, l_pad, budget)
    vmem_limit = int(min(max(2 * est, 32 * 2**20), budget))

    # Zero-padding is exact: padded DAD rows/cols and M rows contribute nothing;
    # padded output rows/lanes are sliced off below.
    dad_p = jnp.zeros((n_pad, n_pad), jnp.bfloat16).at[:N, :N].set(
        dad.astype(jnp.bfloat16))
    m_p = jnp.zeros((n_pad, l_pad), jnp.bfloat16).at[:N, :L].set(
        m.astype(jnp.bfloat16))
    bias_p = jnp.zeros((1, l_pad), jnp.float32).at[:, :L].set(
        bias_row.astype(jnp.float32).reshape(1, L))

    z = pl.pallas_call(
        _dad_matmul_kernel,
        out_shape=jax.ShapeDtypeStruct((n_pad, l_pad), out_dtype),
        grid_spec=pltpu.PrefetchScalarGridSpec(
            num_scalar_prefetch=0,
            grid=(n_pad // tm, n_pad // tk),
            in_specs=[
                pl.BlockSpec((tm, tk), lambda i, k: (i, k)),     # DAD tile
                pl.BlockSpec((tk, l_pad), lambda i, k: (k, 0)),  # folded operand
                pl.BlockSpec((1, l_pad), lambda i, k: (0, 0)),   # bias row (tiny)
            ],
            out_specs=pl.BlockSpec((tm, l_pad), lambda i, k: (i, 0)),
            scratch_shapes=[pltpu.VMEM((tm, l_pad), jnp.float32)],
        ),
        compiler_params=pltpu.CompilerParams(
            dimension_semantics=("parallel", "arbitrary"),
            vmem_limit_bytes=vmem_limit,
        ),
    )(dad_p, m_p, bias_p)

    return z[:N, :L]


def graph_conv(dad: jnp.ndarray, x: jnp.ndarray, weights: jnp.ndarray,
               biases: jnp.ndarray) -> jnp.ndarray:
    """GraphConv forward: (DAD @ x) @ W + b, batched over leading dim of x."""
    B, N, Fin = x.shape
    Fout = weights.shape[1]
    project_first = Fout <= Fin

    if project_first:
        # Apply W first (smaller lane width for the O(N^2) matmul), in plain
        # JAX — no kron(I_B, W), no redundant per-row-tile projection.
        y = jnp.einsum("bnf,fg->bng", x, weights)                 # (B, N, Fout)
        m = jnp.transpose(y, (1, 0, 2)).reshape(N, B * Fout)      # (N, B*Fout)
        bias_row = jnp.tile(biases, B)                            # (B*Fout,)
        z = _dad_matmul(dad, m, bias_row, x.dtype)                # (N, B*Fout)
        return jnp.transpose(z.reshape(N, B, Fout), (1, 0, 2))    # (B, N, Fout)
    else:
        # Fin < Fout: run the N^2 matmul at lane width B*Fin, project after.
        m = jnp.transpose(x, (1, 0, 2)).reshape(N, B * Fin)       # (N, B*Fin)
        bias_row = jnp.zeros((B * Fin,), x.dtype)
        z = _dad_matmul(dad, m, bias_row, x.dtype)                # (N, B*Fin)
        ax = jnp.transpose(z.reshape(N, B, Fin), (1, 0, 2))       # (B, N, Fin)
        return jnp.einsum("bnf,fg->bng", ax, weights) + biases


def xavier_uniform(key, fan_in, fan_out, dtype=jnp.float32):
    bound = jnp.sqrt(6.0 / (fan_in + fan_out))
    return jax.random.uniform(key, (fan_in, fan_out), dtype=dtype,
                              minval=-bound, maxval=bound)


if __name__ == "__main__":
    key = jax.random.PRNGKey(0)
    k_adj, k_x, k_w, k_w2 = jax.random.split(key, 4)

    # Small shapes: batch=2, num_nodes=16, input_dim=4, output_dim=8
    B, N, Fin, Fout = 2, 16, 4, 8

    # Symmetric adjacency with zero diagonal (so self-loops are added).
    a = jax.random.uniform(k_adj, (N, N), dtype=jnp.float32)
    adj = ((a + a.T) > 1.0).astype(jnp.float32)
    adj = adj * (1.0 - jnp.eye(N, dtype=jnp.float32))

    dad = calculate_laplacian_with_self_loop(adj)
    x = jax.random.normal(k_x, (B, N, Fin), dtype=jnp.float32)

    graph_conv_jit = jax.jit(graph_conv)

    # Path 1: Fin < Fout (project after the kernel).
    weights = xavier_uniform(k_w, Fin, Fout)
    biases = jnp.zeros((Fout,), dtype=jnp.float32)
    out = jax.block_until_ready(graph_conv_jit(dad, x, weights, biases))
    ref = jnp.einsum("ij,bjf->bif", dad, x) @ weights + biases
    assert out.shape == (B, N, Fout)
    # bf16 MXU operands with f32 accumulation -> relaxed tolerance.
    assert jnp.allclose(out, ref, atol=2e-2, rtol=2e-2)

    # Path 2: Fout <= Fin (project before the kernel).
    weights2 = xavier_uniform(k_w2, Fout, Fin)
    biases2 = jnp.full((Fin,), 0.1, dtype=jnp.float32)
    x2 = jnp.transpose(out, (0, 1, 2))  # reuse (B, N, Fout) activations
    out2 = jax.block_until_ready(graph_conv_jit(dad, x2, weights2, biases2))
    ref2 = jnp.einsum("ij,bjf->bif", dad, x2) @ weights2 + biases2
    assert out2.shape == (B, N, Fin)
    assert jnp.allclose(out2, ref2, atol=2e-2, rtol=2e-2)

    print("KERNEL_OK")
</pallas_src>

<mosaic_0001>
module attributes {stable_mosaic.version = 11 : i64} {
  func.func @_dad_matmul_kernel(%arg0: i32, %arg1: i32, %arg2: memref<128x128xbf16, #tpu.memory_space<vmem>>, %arg3: memref<128x128xbf16, #tpu.memory_space<vmem>>, %arg4: memref<1x128xf32, #tpu.memory_space<vmem>>, %arg5: memref<128x128xf32, #tpu.memory_space<vmem>>, %arg6: memref<128x128xf32, #tpu.memory_space<vmem>>) attributes {dimension_semantics = [#tpu.dimension_semantics<parallel>, #tpu.dimension_semantics<arbitrary>], iteration_bounds = array<i64: 1, 1>, scalar_prefetch = 0 : i64, scratch_operands = 1 : i64, tpu.core_type = #tpu.core_type<tc>, window_params = [{transform_indices = @transform_0, window_bounds = array<i64: 128, 128>}, {transform_indices = @transform_1, window_bounds = array<i64: 128, 128>}, {pipeline_mode = #tpu.pipeline_mode<synchronous>, transform_indices = @transform_2, window_bounds = array<i64: 1, 128>}, {transform_indices = @transform_3, window_bounds = array<i64: 128, 128>}]} {
    %c0_i32 = arith.constant 0 : i32
    %0 = arith.cmpi eq, %arg1, %c0_i32 : i32
    %1 = arith.extui %0 : i1 to i32
    %c0_i32_0 = arith.constant 0 : i32
    %2 = arith.cmpi ne, %1, %c0_i32_0 : i32
    scf.if %2 {
      %cst_10 = arith.constant 0.000000e+00 : f32
      %12 = vector.broadcast %cst_10 : f32 to vector<128x128xf32>
      %c0_11 = arith.constant 0 : index
      %c0_12 = arith.constant 0 : index
      %13 = vector.load %arg6[%c0_11, %c0_12] : memref<128x128xf32, #tpu.memory_space<vmem>>, vector<128x128xf32>
      tpu.vector_store %arg6[%c0_11, %c0_12], %12 {strides = array<i32>} : memref<128x128xf32, #tpu.memory_space<vmem>>, vector<128x128xf32>,
    } else {
    }
    %c0 = arith.constant 0 : index
    %c0_1 = arith.constant 0 : index
    %3 = vector.load %arg6[%c0, %c0_1] : memref<128x128xf32, #tpu.memory_space<vmem>>, vector<128x128xf32>
    %c0_2 = arith.constant 0 : index
    %c0_3 = arith.constant 0 : index
    %4 = vector.load %arg2[%c0_2, %c0_3] : memref<128x128xbf16, #tpu.memory_space<vmem>>, vector<128x128xbf16>
    %c0_4 = arith.constant 0 : index
    %c0_5 = arith.constant 0 : index
    %5 = vector.load %arg3[%c0_4, %c0_5] : memref<128x128xbf16, #tpu.memory_space<vmem>>, vector<128x128xbf16>
    %cst = arith.constant dense<0.000000e+00> : vector<128x128xf32>
    %6 = tpu.matmul %4, %5, %cst {dimension_numbers = #tpu.dot_dimension_numbers<[1], [0], [0], [1], [0, 0, 1, 1], [], []>} : vector<128x128xbf16>, vector<128x128xbf16>, vector<128x128xf32> -> vector<128x128xf32>
    %7 = arith.addf %3, %6 : vector<128x128xf32>
    %c0_6 = arith.constant 0 : index
    %c0_7 = arith.constant 0 : index
    %8 = vector.load %arg6[%c0_6, %c0_7] : memref<128x128xf32, #tpu.memory_space<vmem>>, vector<128x128xf32>
    tpu.vector_store %arg6[%c0_6, %c0_7], %7 {strides = array<i32>} : memref<128x128xf32, #tpu.memory_space<vmem>>, vector<128x128xf32>,
    %c0_i32_8 = arith.constant 0 : i32
    %9 = arith.cmpi eq, %arg1, %c0_i32_8 : i32
    %10 = arith.extui %9 : i1 to i32
    %c0_i32_9 = arith.constant 0 : i32
    %11 = arith.cmpi ne, %10, %c0_i32_9 : i32
    scf.if %11 {
      %c0_10 = arith.constant 0 : index
      %c0_11 = arith.constant 0 : index
      %12 = vector.load %arg6[%c0_10, %c0_11] : memref<128x128xf32, #tpu.memory_space<vmem>>, vector<128x128xf32>
      %c0_12 = arith.constant 0 : index
      %c0_13 = arith.constant 0 : index
      %13 = vector.load %arg4[%c0_12, %c0_13] : memref<1x128xf32, #tpu.memory_space<vmem>>, vector<1x128xf32>
      %14 = vector.broadcast %13 : vector<1x128xf32> to vector<128x128xf32>
      %15 = arith.addf %12, %14 : vector<128x128xf32>
      %c0_14 = arith.constant 0 : index
      %c0_15 = arith.constant 0 : index
      %16 = vector.load %arg5[%c0_14, %c0_15] : memref<128x128xf32, #tpu.memory_space<vmem>>, vector<128x128xf32>
      tpu.vector_store %arg5[%c0_14, %c0_15], %15 {strides = array<i32>} : memref<128x128xf32, #tpu.memory_space<vmem>>, vector<128x128xf32>,
    } else {
    }
    return
  }
  func.func @transform_0(%arg0: i32, %arg1: i32) -> (i32, i32) {
    %c0_i32 = arith.constant 0 : i32
    return %arg0, %arg1 : i32, i32
  }
  func.func @transform_1(%arg0: i32, %arg1: i32) -> (i32, i32) {
    %c0_i32 = arith.constant 0 : i32
    %c0_i32_0 = arith.constant 0 : i32
    return %arg1, %c0_i32 : i32, i32
  }
  func.func @transform_2(%arg0: i32, %arg1: i32) -> (i32, i32) {
    %c0_i32 = arith.constant 0 : i32
    %c0_i32_0 = arith.constant 0 : i32
    %c0_i32_1 = arith.constant 0 : i32
    return %c0_i32, %c0_i32_0 : i32, i32
  }
  func.func @transform_3(%arg0: i32, %arg1: i32) -> (i32, i32) {
    %c0_i32 = arith.constant 0 : i32
    %c0_i32_0 = arith.constant 0 : i32
    return %arg0, %c0_i32 : i32, i32
  }
}

</mosaic_0001>

<llo_original>
// kernel: graph_conv.1
$region0: #{graph_conv.1}
  #allocation0 [shape = 'u32[]', space=smem, size = 0x4, offset = 0x4, fixed_abs, tag = 'smem constant byte address 0x4 - core index']
  #allocation1 [shape = 'u32[72,128]{1,0:T(1,128)}', space=vmem, size = 0x9000, scoped, tag = 'internal scratch']
  #allocation2 [shape = 'f32[128,128]{1,0:T(8,128)}', space=vmem, size = 0x10000, scoped, tag = 'scratch operand']
  %s0 = inlined_call_operand.vmem [shape: bf16[128,128], index: 0, kind: input, shape index: {}]
  %s1 = inlined_call_operand.vmem [shape: bf16[128,128], index: 1, kind: input, shape index: {}]
  %s2 = inlined_call_operand.vmem [shape: f32[1,128], index: 2, kind: input, shape index: {}]
  %s3 = inlined_call_operand.vmem [shape: f32[128,128], index: 3, kind: output, shape index: {}]
  %s4 = sld [smem:[#allocation0]]
  $region30: #{graph_conv.1} parent=0
    _
  %s6 = ssub.s32 1, %s4
  %s7 = scalar_select 0, %s6, %s4
  // Predicated region
  $region2: #{graph_conv.1} parent=0 // pred_check
    _
  $region3: #{graph_conv.1} parent=0 // pred_check_branch
    %9 = sbr.rel (0) target = $region5
  $region4: #{graph_conv.1} parent=0 // pred_region
    _
  $region5: #{graph_conv.1} parent=0 // pred_fallthru
    _
  // Predicated region
  $region6: #{graph_conv.1} parent=0 // pred_check
    _
  $region7: #{graph_conv.1} parent=0 // pred_check_branch
    %11 = sbr.rel (0) target = $region9
  $region8: #{graph_conv.1} parent=0 // pred_region
    _
  $region9: #{graph_conv.1} parent=0 // pred_fallthru
    _
  // Predicated region
  $region10: #{graph_conv.1} parent=0 // pred_check
    _
  $region11: #{graph_conv.1} parent=0 // pred_check_branch
    %13 = sbr.rel (0) target = $region13
  $region12: #{graph_conv.1} parent=0 // pred_region
    _
  $region13: #{graph_conv.1} parent=0 // pred_fallthru
    _
  %p14 = scmp.eq.s32.totalorder 0, 0
  // Predicated region
  $region14: #{graph_conv.1} parent=0 // pred_check
    %p15 = pneg %p14
  $region15: #{graph_conv.1} parent=0 // pred_check_branch
    %17 = sbr.rel (%p15) target = $region17
  $region16: #{graph_conv.1} parent=0 // pred_region
    %18 = vst [vmem:[#allocation2] sm:$0xff] 0.0
    %19 = vst [vmem:[#allocation2 + $0x8] sm:$0xff] 0.0
    %20 = vst [vmem:[#allocation2 + $0x10] sm:$0xff] 0.0
    %21 = vst [vmem:[#allocation2 + $0x18] sm:$0xff] 0.0
    %22 = vst [vmem:[#allocation2 + $0x20] sm:$0xff] 0.0
    %23 = vst [vmem:[#allocation2 + $0x28] sm:$0xff] 0.0
    %24 = vst [vmem:[#allocation2 + $0x30] sm:$0xff] 0.0
    %25 = vst [vmem:[#allocation2 + $0x38] sm:$0xff] 0.0
    %26 = vst [vmem:[#allocation2 + $0x40] sm:$0xff] 0.0
    %27 = vst [vmem:[#allocation2 + $0x48] sm:$0xff] 0.0
    %28 = vst [vmem:[#allocation2 + $0x50] sm:$0xff] 0.0
    %29 = vst [vmem:[#allocation2 + $0x58] sm:$0xff] 0.0
    %30 = vst [vmem:[#allocation2 + $0x60] sm:$0xff] 0.0
    %31 = vst [vmem:[#allocation2 + $0x68] sm:$0xff] 0.0
    %32 = vst [vmem:[#allocation2 + $0x70] sm:$0xff] 0.0
    %33 = vst [vmem:[#allocation2 + $0x78] sm:$0xff] 0.0
  $region17: #{graph_conv.1} parent=0 // pred_fallthru
    _
  %v34 = vld [vmem:[#allocation2] sm:$0xff]
  %v35 = vld [vmem:[#allocation2 + $0x8] sm:$0xff]
  %v36 = vld [vmem:[#allocation2 + $0x10] sm:$0xff]
  %v37 = vld [vmem:[#allocation2 + $0x18] sm:$0xff]
  %v38 = vld [vmem:[#allocation2 + $0x20] sm:$0xff]
  %v39 = vld [vmem:[#allocation2 + $0x28] sm:$0xff]
  %v40 = vld [vmem:[#allocation2 + $0x30] sm:$0xff]
  %v41 = vld [vmem:[#allocation2 + $0x38] sm:$0xff]
  %v42 = vld [vmem:[#allocation2 + $0x40] sm:$0xff]
  %v43 = vld [vmem:[#allocation2 + $0x48] sm:$0xff]
  %v44 = vld [vmem:[#allocation2 + $0x50] sm:$0xff]
  %v45 = vld [vmem:[#allocation2 + $0x58] sm:$0xff]
  %v46 = vld [vmem:[#allocation2 + $0x60] sm:$0xff]
  %v47 = vld [vmem:[#allocation2 + $0x68] sm:$0xff]
  %v48 = vld [vmem:[#allocation2 + $0x70] sm:$0xff]
  %v49 = vld [vmem:[#allocation2 + $0x78] sm:$0xff]
  %v50 = vld [vmem:[%s0] sm:$0xf]
  %v51 = vld [vmem:[%s0 + $0x4] sm:$0xf]
  %v52 = vld [vmem:[%s0 + $0x8] sm:$0xf]
  %v53 = vld [vmem:[%s0 + $0xc] sm:$0xf]
  %v54 = vld [vmem:[%s0 + $0x10] sm:$0xf]
  %v55 = vld [vmem:[%s0 + $0x14] sm:$0xf]
  %v56 = vld [vmem:[%s0 + $0x18] sm:$0xf]
  %v57 = vld [vmem:[%s0 + $0x1c] sm:$0xf]
  %v58 = vld [vmem:[%s0 + $0x20] sm:$0xf]
  %v59 = vld [vmem:[%s0 + $0x24] sm:$0xf]
  %v60 = vld [vmem:[%s0 + $0x28] sm:$0xf]
  %v61 = vld [vmem:[%s0 + $0x2c] sm:$0xf]
  %v62 = vld [vmem:[%s0 + $0x30] sm:$0xf]
  %v63 = vld [vmem:[%s0 + $0x34] sm:$0xf]
  %v64 = vld [vmem:[%s0 + $0x38] sm:$0xf]
  %v65 = vld [vmem:[%s0 + $0x3c] sm:$0xf]
  %v66 = vld [vmem:[%s1] sm:$0xf]
  %v67 = vld [vmem:[%s1 + $0x4] sm:$0xf]
  %v68 = vld [vmem:[%s1 + $0x8] sm:$0xf]
  %v69 = vld [vmem:[%s1 + $0xc] sm:$0xf]
  %v70 = vld [vmem:[%s1 + $0x10] sm:$0xf]
  %v71 = vld [vmem:[%s1 + $0x14] sm:$0xf]
  %v72 = vld [vmem:[%s1 + $0x18] sm:$0xf]
  %v73 = vld [vmem:[%s1 + $0x1c] sm:$0xf]
  %v74 = vld [vmem:[%s1 + $0x20] sm:$0xf]
  %v75 = vld [vmem:[%s1 + $0x24] sm:$0xf]
  %v76 = vld [vmem:[%s1 + $0x28] sm:$0xf]
  %v77 = vld [vmem:[%s1 + $0x2c] sm:$0xf]
  %v78 = vld [vmem:[%s1 + $0x30] sm:$0xf]
  %v79 = vld [vmem:[%s1 + $0x34] sm:$0xf]
  %v80 = vld [vmem:[%s1 + $0x38] sm:$0xf]
  %v81 = vld [vmem:[%s1 + $0x3c] sm:$0xf]
  %v98 = vunpack.c.l.b16 %v50
  %v99 = vunpack.c.l.b16 %v51
  %v100 = vunpack.c.l.b16 %v52
  %v101 = vunpack.c.l.b16 %v53
  %v102 = vunpack.c.l.b16 %v54
  %v103 = vunpack.c.l.b16 %v55
  %v104 = vunpack.c.l.b16 %v56
  %v105 = vunpack.c.l.b16 %v57
  %v106 = vunpack.c.l.b16 %v58
  %v107 = vunpack.c.l.b16 %v59
  %v108 = vunpack.c.l.b16 %v60
  %v109 = vunpack.c.l.b16 %v61
  %v110 = vunpack.c.l.b16 %v62
  %v111 = vunpack.c.l.b16 %v63
  %v112 = vunpack.c.l.b16 %v64
  %v113 = vunpack.c.l.b16 %v65
  %v114 = vpack.c.b16 %v99, %v98
  %v115 = vpack.c.b16 %v101, %v100
  %v116 = vpack.c.b16 %v103, %v102
  %v117 = vpack.c.b16 %v105, %v104
  %v118 = vpack.c.b16 %v107, %v106
  %v119 = vpack.c.b16 %v109, %v108
  %v120 = vpack.c.b16 %v111, %v110
  %v121 = vpack.c.b16 %v113, %v112
  %v146 = vunpack.c.l.b16 %v66
  %v147 = vunpack.c.l.b16 %v67
  %v148 = vunpack.c.l.b16 %v68
  %v149 = vunpack.c.l.b16 %v69
  %v150 = vunpack.c.l.b16 %v70
  %v151 = vunpack.c.l.b16 %v71
  %v152 = vunpack.c.l.b16 %v72
  %v153 = vunpack.c.l.b16 %v73
  %v154 = vunpack.c.l.b16 %v74
  %v155 = vunpack.c.l.b16 %v75
  %v156 = vunpack.c.l.b16 %v76
  %v157 = vunpack.c.l.b16 %v77
  %v158 = vunpack.c.l.b16 %v78
  %v159 = vunpack.c.l.b16 %v79
  %v160 = vunpack.c.l.b16 %v80
  %v161 = vunpack.c.l.b16 %v81
  %v162 = vpack.c.b16 %v147, %v146
  %v163 = vpack.c.b16 %v149, %v148
  %v164 = vpack.c.b16 %v151, %v150
  %v165 = vpack.c.b16 %v153, %v152
  %v166 = vpack.c.b16 %v155, %v154
  %v167 = vpack.c.b16 %v157, %v156
  %v168 = vpack.c.b16 %v159, %v158
  %v169 = vpack.c.b16 %v161, %v160
  %178 = vmatpush.bf16.msra.mxu0 %v169
  %179 = vmatpush.bf16.msra.mxu0 %v168
  %180 = vmatpush.bf16.msra.mxu0 %v167
  %181 = vmatpush.bf16.msra.mxu0 %v166
  %182 = vmatpush.bf16.msra.mxu0 %v165
  %183 = vmatpush.bf16.msra.mxu0 %v164
  %184 = vmatpush.bf16.msra.mxu0 %v163
  %185 = vmatpush.bf16.msra.mxu0 %v162
  %186 = vmatmul.bf16.gmra.mxu0 %v114
  %v187 = vpop.f32.mrf.mxu0
  %v188 = vadd.f32 0.0, %v187
  %v189 = vpop.f32.mrf.mxu0
  %v190 = vadd.f32 0.0, %v189
  %191 = vmatmul.bf16.gmra.mxu0 %v115
  %v192 = vpop.f32.mrf.mxu0
  %v193 = vadd.f32 0.0, %v192
  %v194 = vpop.f32.mrf.mxu0
  %v195 = vadd.f32 0.0, %v194
  %196 = vmatmul.bf16.gmra.mxu0 %v116
  %v197 = vpop.f32.mrf.mxu0
  %v198 = vadd.f32 0.0, %v197
  %v199 = vpop.f32.mrf.mxu0
  %v200 = vadd.f32 0.0, %v199
  %201 = vmatmul.bf16.gmra.mxu0 %v117
  %v202 = vpop.f32.mrf.mxu0
  %v203 = vadd.f32 0.0, %v202
  %v204 = vpop.f32.mrf.mxu0
  %v205 = vadd.f32 0.0, %v204
  %206 = vmatmul.bf16.gmra.mxu0 %v118
  %v207 = vpop.f32.mrf.mxu0
  %v208 = vadd.f32 0.0, %v207
  %v209 = vpop.f32.mrf.mxu0
  %v210 = vadd.f32 0.0, %v209
  %211 = vmatmul.bf16.gmra.mxu0 %v119
  %v212 = vpop.f32.mrf.mxu0
  %v213 = vadd.f32 0.0, %v212
  %v214 = vpop.f32.mrf.mxu0
  %v215 = vadd.f32 0.0, %v214
  %216 = vmatmul.bf16.gmra.mxu0 %v120
  %v217 = vpop.f32.mrf.mxu0
  %v218 = vadd.f32 0.0, %v217
  %v219 = vpop.f32.mrf.mxu0
  %v220 = vadd.f32 0.0, %v219
  %221 = vmatmul.bf16.gmra.mxu0 %v121
  %v222 = vpop.f32.mrf.mxu0
  %v223 = vadd.f32 0.0, %v222
  %v224 = vpop.f32.mrf.mxu0
  %v225 = vadd.f32 0.0, %v224
  %226 = vdwg.mxu0
  %v227 = vadd.f32 %v34, %v188
  %v228 = vadd.f32 %v35, %v190
  %v229 = vadd.f32 %v36, %v193
  %v230 = vadd.f32 %v37, %v195
  %v231 = vadd.f32 %v38, %v198
  %v232 = vadd.f32 %v39, %v200
  %v233 = vadd.f32 %v40, %v203
  %v234 = vadd.f32 %v41, %v205
  %v235 = vadd.f32 %v42, %v208
  %v236 = vadd.f32 %v43, %v210
  %v237 = vadd.f32 %v44, %v213
  %v238 = vadd.f32 %v45, %v215
  %v239 = vadd.f32 %v46, %v218
  %v240 = vadd.f32 %v47, %v220
  %v241 = vadd.f32 %v48, %v223
  %v242 = vadd.f32 %v49, %v225
  %243 = vst [vmem:[#allocation2] sm:$0xff] %v227
  %244 = vst [vmem:[#allocation2 + $0x8] sm:$0xff] %v228
  %245 = vst [vmem:[#allocation2 + $0x10] sm:$0xff] %v229
  %246 = vst [vmem:[#allocation2 + $0x18] sm:$0xff] %v230
  %247 = vst [vmem:[#allocation2 + $0x20] sm:$0xff] %v231
  %248 = vst [vmem:[#allocation2 + $0x28] sm:$0xff] %v232
  %249 = vst [vmem:[#allocation2 + $0x30] sm:$0xff] %v233
  %250 = vst [vmem:[#allocation2 + $0x38] sm:$0xff] %v234
  %251 = vst [vmem:[#allocation2 + $0x40] sm:$0xff] %v235
  %252 = vst [vmem:[#allocation2 + $0x48] sm:$0xff] %v236
  %253 = vst [vmem:[#allocation2 + $0x50] sm:$0xff] %v237
  %254 = vst [vmem:[#allocation2 + $0x58] sm:$0xff] %v238
  %255 = vst [vmem:[#allocation2 + $0x60] sm:$0xff] %v239
  %256 = vst [vmem:[#allocation2 + $0x68] sm:$0xff] %v240
  %257 = vst [vmem:[#allocation2 + $0x70] sm:$0xff] %v241
  %258 = vst [vmem:[#allocation2 + $0x78] sm:$0xff] %v242
  // Predicated region
  $region18: #{graph_conv.1} parent=0 // pred_check
    %p259 = pneg %p14
  $region19: #{graph_conv.1} parent=0 // pred_check_branch
    %261 = sbr.rel (%p259) target = $region21
  $region20: #{graph_conv.1} parent=0 // pred_region
    %v262 = vld [vmem:[#allocation2] sm:$0xff]
    %v263 = vld [vmem:[#allocation2 + $0x8] sm:$0xff]
    %v264 = vld [vmem:[#allocation2 + $0x10] sm:$0xff]
    %v265 = vld [vmem:[#allocation2 + $0x18] sm:$0xff]
    %v266 = vld [vmem:[#allocation2 + $0x20] sm:$0xff]
    %v267 = vld [vmem:[#allocation2 + $0x28] sm:$0xff]
    %v268 = vld [vmem:[#allocation2 + $0x30] sm:$0xff]
    %v269 = vld [vmem:[#allocation2 + $0x38] sm:$0xff]
    %v270 = vld [vmem:[#allocation2 + $0x40] sm:$0xff]
    %v271 = vld [vmem:[#allocation2 + $0x48] sm:$0xff]
    %v272 = vld [vmem:[#allocation2 + $0x50] sm:$0xff]
    %v273 = vld [vmem:[#allocation2 + $0x58] sm:$0xff]
    %v274 = vld [vmem:[#allocation2 + $0x60] sm:$0xff]
    %v275 = vld [vmem:[#allocation2 + $0x68] sm:$0xff]
    %v276 = vld [vmem:[#allocation2 + $0x70] sm:$0xff]
    %v277 = vld [vmem:[#allocation2 + $0x78] sm:$0xff]
    %v278 = vld [vmem:[%s2] sm:$0x1]
    %v280 = vperm.slane %v278, 0
    %v282 = vadd.f32 %v262, %v280
    %v283 = vadd.f32 %v263, %v280
    %v284 = vadd.f32 %v264, %v280
    %v285 = vadd.f32 %v265, %v280
    %v286 = vadd.f32 %v266, %v280
    %v287 = vadd.f32 %v267, %v280
    %v288 = vadd.f32 %v268, %v280
    %v289 = vadd.f32 %v269, %v280
    %v290 = vadd.f32 %v270, %v280
    %v291 = vadd.f32 %v271, %v280
    %v292 = vadd.f32 %v272, %v280
    %v293 = vadd.f32 %v273, %v280
    %v294 = vadd.f32 %v274, %v280
    %v295 = vadd.f32 %v275, %v280
    %v296 = vadd.f32 %v276, %v280
    %v297 = vadd.f32 %v277, %v280
    %298 = vst [vmem:[%s3] sm:$0xff] %v282
    %299 = vst [vmem:[%s3 + $0x8] sm:$0xff] %v283
    %300 = vst [vmem:[%s3 + $0x10] sm:$0xff] %v284
    %301 = vst [vmem:[%s3 + $0x18] sm:$0xff] %v285
    %302 = vst [vmem:[%s3 + $0x20] sm:$0xff] %v286
    %303 = vst [vmem:[%s3 + $0x28] sm:$0xff] %v287
    %304 = vst [vmem:[%s3 + $0x30] sm:$0xff] %v288
    %305 = vst [vmem:[%s3 + $0x38] sm:$0xff] %v289
    %306 = vst [vmem:[%s3 + $0x40] sm:$0xff] %v290
    %307 = vst [vmem:[%s3 + $0x48] sm:$0xff] %v291
    %308 = vst [vmem:[%s3 + $0x50] sm:$0xff] %v292
    %309 = vst [vmem:[%s3 + $0x58] sm:$0xff] %v293
    %310 = vst [vmem:[%s3 + $0x60] sm:$0xff] %v294
    %311 = vst [vmem:[%s3 + $0x68] sm:$0xff] %v295
    %312 = vst [vmem:[%s3 + $0x70] sm:$0xff] %v296
    %313 = vst [vmem:[%s3 + $0x78] sm:$0xff] %v297
  $region21: #{graph_conv.1} parent=0 // pred_fallthru
    _
  // Predicated region
  $region22: #{graph_conv.1} parent=0 // pred_check
    _
  $region23: #{graph_conv.1} parent=0 // pred_check_branch
    %315 = sbr.rel (0) target = $region25
  $region24: #{graph_conv.1} parent=0 // pred_region
    _
  $region25: #{graph_conv.1} parent=0 // pred_fallthru
    _
  // Predicated region
  $region26: #{graph_conv.1} parent=0 // pred_check
    _
  $region27: #{graph_conv.1} parent=0 // pred_check_branch
    %317 = sbr.rel (0) target = $region29
  $region28: #{graph_conv.1} parent=0 // pred_region
    _
  $region29: #{graph_conv.1} parent=0 // pred_fallthru
    _

</llo_original>
